<compile_context>
chip_gen: v6e
topology: v6e:2x2x1
jax: 0.10.0
libtpu: 0.0.40
codegen_flags: <defaults>
</compile_context>

<pallas_src>
import jax
import jax.numpy as jnp
from jax import lax
from jax.experimental import pallas as pl
from jax.experimental.pallas import tpu as pltpu

_MB = 1024 * 1024


def _chip_caps():
    """(input double-buffer budget, vmem-limit cap, TensorCores/chip)."""
    kind = ""
    try:
        kind = jax.devices()[0].device_kind.lower()
    except Exception:
        pass
    if "v7" in kind:
        # v7x: 64 MiB VMEM per TensorCore, 2 TCs per chip.
        return 30 * _MB, 56 * _MB, 2
    # v5e / v6e (and anything unknown): 128 MiB physical VMEM, 1 TC.
    return 56 * _MB, 100 * _MB, 1


def _round_down_128(n):
    return max(128, (int(n) // 128) * 128)


def _round_up_128(n):
    return ((int(n) + 127) // 128) * 128


def _round_up(n, m):
    return ((int(n) + m - 1) // m) * m


def _make_gram_kernel(*, hw, tk, kpers, may_mask, cast_dtype):
    def kernel(x_ref, o_ref):
        # x_ref: (1, C, tk)    input tile for (split s, batch b, local chunk k)
        # o_ref: (1, 1, C, C)  f32 partial Gram, VMEM-resident across the k axis
        s = pl.program_id(0)
        k = pl.program_id(2)
        gk = s * kpers + k  # global reduction-chunk index

        @pl.when(k == 0)
        def _():
            o_ref[...] = jnp.zeros_like(o_ref)

        def accum(xt):
            if cast_dtype is not None:
                xt = xt.astype(cast_dtype)
            # Contract the LAST dim of both operands -> X @ X^T on the MXU
            # without materializing X^T; accumulate in f32.
            o_ref[0, 0] += lax.dot_general(
                xt, xt,
                dimension_numbers=(((1,), (1,)), ((), ())),
                preferred_element_type=jnp.float32,
            )

        if may_mask:
            # Partial (or fully-overrun) chunk: out-of-bounds lanes hold
            # unspecified data and must be zeroed before the matmul.
            is_partial = (gk + 1) * tk > hw

            @pl.when(jnp.logical_not(is_partial))
            def _():
                accum(x_ref[0])

            @pl.when(is_partial)
            def _():
                x = x_ref[0]
                valid = hw - gk * tk  # may be <= 0 for fully-overrun chunks
                lane = lax.broadcasted_iota(jnp.int32, x.shape, 1)
                accum(jnp.where(lane < valid, x, jnp.zeros_like(x)))
        else:
            accum(x_ref[0])

    return kernel


def gram(x, *, tk=None, num_splits=None, matmul_dtype=None):
    """x: (B, C, H, W) -> (B, C, C) Gram matrices (same dtype as x).

    matmul_dtype: optionally cast MXU operands (e.g. jnp.bfloat16) for large-C
    f32 inputs that are MXU-bound; default None keeps torch-matching numerics.
    """
    B, C, H, W = x.shape
    HW = H * W
    itemsize = jnp.dtype(x.dtype).itemsize
    input_budget, limit_cap, cores = _chip_caps()

    # ---- reduction split across TensorCores when B is small (v7x) ---------
    if num_splits is None:
        num_splits = 2 if (cores >= 2 and B == 1 and HW >= 256) else 1
    S = max(1, int(num_splits))

    # Layout-padded sizes for VMEM accounting ((8, 128) tiling).
    c_sub = _round_up(C, 8)
    c_lane = _round_up_128(C)
    out_db_bytes = 2 * c_sub * c_lane * 4  # double-buffered f32 output block

    # ---- choose the reduction tile TK (multiple of 128 lanes) -------------
    if tk is None:
        budget = max(2 * c_sub * 128 * itemsize, input_budget - out_db_bytes)
        tk_cap = _round_down_128(budget // (2 * c_sub * itemsize))
        # Aim for >= ~4 reduction steps per split so the pipeline has a steady
        # state (per-step overhead ~0.35us amortizes away).
        tk_target = _round_up_128(pl.cdiv(HW, 4 * S))
        tk = min(tk_cap, tk_target, _round_up_128(HW))
    tk = _round_down_128(tk)
    if tk >= HW:
        tk = HW  # single full-extent block (always layout-legal, no masking)

    num_k = pl.cdiv(HW, tk)
    kpers = pl.cdiv(num_k, S)  # reduction chunks per split
    may_mask = (HW % tk != 0) or (kpers * S != num_k)

    in_db_bytes = 2 * c_sub * tk * itemsize
    vmem_limit = int(min(limit_cap, max(16 * _MB, in_db_bytes + out_db_bytes + 8 * _MB)))

    x2 = x.reshape(B, C, HW)  # pure metadata reshape, no extra HBM pass

    kernel = _make_gram_kernel(
        hw=HW, tk=tk, kpers=kpers, may_mask=may_mask, cast_dtype=matmul_dtype
    )

    cost = pl.CostEstimate(
        flops=2 * B * C * C * HW,
        transcendentals=0,
        bytes_accessed=B * C * HW * itemsize + S * B * C * C * 4,
    )

    out = pl.pallas_call(
        kernel,
        out_shape=jax.ShapeDtypeStruct((S, B, C, C), jnp.float32),
        grid_spec=pltpu.PrefetchScalarGridSpec(
            num_scalar_prefetch=0,
            grid=(S, B, kpers),
            in_specs=[
                pl.BlockSpec(
                    (1, C, tk),
                    lambda s, b, k: (b, 0, jnp.minimum(s * kpers + k, num_k - 1)),
                )
            ],
            out_specs=pl.BlockSpec((1, 1, C, C), lambda s, b, k: (s, b, 0, 0)),
        ),
        compiler_params=pltpu.CompilerParams(
            dimension_semantics=("parallel", "parallel", "arbitrary"),
            vmem_limit_bytes=vmem_limit,
        ),
        cost_estimate=cost,
    )(x2)

    g = out.sum(axis=0) if S > 1 else out[0]
    return g.astype(x.dtype)


if __name__ == "__main__":
    key = jax.random.PRNGKey(0)
    B, C, H, W = 2, 4, 16, 16
    x = jax.random.normal(key, (B, C, H, W), dtype=jnp.float32)

    out = jax.block_until_ready(gram(x))

    xf = x.reshape(B, C, H * W)
    ref = jnp.einsum("bce,bde->bcd", xf, xf)
    assert out.shape == (B, C, C)
    assert out.dtype == x.dtype
    assert jnp.allclose(out, ref, atol=1e-4, rtol=1e-4)

    # Also exercise the masked partial-tail path (HW % TK != 0) and a forced
    # 2-way reduction split at small shapes.
    x3 = jax.random.normal(jax.random.PRNGKey(1), (1, 6, 9, 15), dtype=jnp.float32)
    out3 = jax.block_until_ready(gram(x3, tk=128, num_splits=2))
    xf3 = x3.reshape(1, 6, 9 * 15)
    ref3 = jnp.einsum("bce,bde->bcd", xf3, xf3)
    assert jnp.allclose(out3, ref3, atol=1e-4, rtol=1e-4)

    print("KERNEL_OK")
</pallas_src>

<mosaic_0001>
module attributes {stable_mosaic.version = 11 : i64} {
  func.func @kernel(%arg0: i32, %arg1: i32, %arg2: i32, %arg3: memref<1x4x128xf32, #tpu.memory_space<vmem>>, %arg4: memref<1x1x4x4xf32, #tpu.memory_space<vmem>>) attributes {dimension_semantics = [#tpu.dimension_semantics<parallel>, #tpu.dimension_semantics<parallel>, #tpu.dimension_semantics<arbitrary>], iteration_bounds = array<i64: 1, 2, 2>, scalar_prefetch = 0 : i64, scratch_operands = 0 : i64, tpu.core_type = #tpu.core_type<tc>, window_params = [{transform_indices = @transform_0, window_bounds = array<i64: 1, 4, 128>}, {transform_indices = @transform_1, window_bounds = array<i64: 1, 1, 4, 4>}]} {
    %c0_i32 = arith.constant 0 : i32
    %0 = arith.cmpi eq, %arg2, %c0_i32 : i32
    %1 = arith.extui %0 : i1 to i32
    %c0_i32_0 = arith.constant 0 : i32
    %2 = arith.cmpi ne, %1, %c0_i32_0 : i32
    scf.if %2 {
      %cst_11 = arith.constant 0.000000e+00 : f32
      %12 = vector.broadcast %cst_11 : f32 to vector<1x1x4x4xf32>
      %c0_12 = arith.constant 0 : index
      %c0_13 = arith.constant 0 : index
      %c0_14 = arith.constant 0 : index
      %c0_15 = arith.constant 0 : index
      %13 = vector.load %arg4[%c0_12, %c0_13, %c0_14, %c0_15] : memref<1x1x4x4xf32, #tpu.memory_space<vmem>>, vector<1x1x4x4xf32>
      tpu.vector_store %arg4[%c0_12, %c0_13, %c0_14, %c0_15], %12 {strides = array<i32>} : memref<1x1x4x4xf32, #tpu.memory_space<vmem>>, vector<1x1x4x4xf32>,
    } else {
    }
    %c0 = arith.constant 0 : index
    %c0_1 = arith.constant 0 : index
    %c0_2 = arith.constant 0 : index
    %3 = vector.load %arg3[%c0, %c0_1, %c0_2] : memref<1x4x128xf32, #tpu.memory_space<vmem>>, vector<1x4x128xf32>
    %4 = vector.shape_cast %3 : vector<1x4x128xf32> to vector<4x128xf32>
    %c0_3 = arith.constant 0 : index
    %c0_4 = arith.constant 0 : index
    %c0_5 = arith.constant 0 : index
    %c0_6 = arith.constant 0 : index
    %5 = vector.load %arg4[%c0_3, %c0_4, %c0_5, %c0_6] : memref<1x1x4x4xf32, #tpu.memory_space<vmem>>, vector<1x1x4x4xf32>
    %6 = vector.shape_cast %5 : vector<1x1x4x4xf32> to vector<4x4xf32>
    %cst = arith.constant dense<0.000000e+00> : vector<4x4xf32>
    %7 = tpu.matmul %4, %4, %cst {dimension_numbers = #tpu.dot_dimension_numbers<[1], [1], [0], [0], [0, 0, 1, 0], [], []>} : vector<4x128xf32>, vector<4x128xf32>, vector<4x4xf32> -> vector<4x4xf32>
    %8 = arith.addf %6, %7 : vector<4x4xf32>
    %c0_7 = arith.constant 0 : index
    %c0_8 = arith.constant 0 : index
    %c0_9 = arith.constant 0 : index
    %c0_10 = arith.constant 0 : index
    %9 = vector.load %arg4[%c0_7, %c0_8, %c0_9, %c0_10] : memref<1x1x4x4xf32, #tpu.memory_space<vmem>>, vector<1x1x4x4xf32>
    %10 = vector.shape_cast %9 : vector<1x1x4x4xf32> to vector<4x4xf32>
    %11 = vector.shape_cast %8 : vector<4x4xf32> to vector<1x1x4x4xf32>
    tpu.vector_store %arg4[%c0_7, %c0_8, %c0_9, %c0_10], %11 {strides = array<i32>} : memref<1x1x4x4xf32, #tpu.memory_space<vmem>>, vector<1x1x4x4xf32>,
    return
  }
  func.func @transform_0(%arg0: i32, %arg1: i32, %arg2: i32) -> (i32, i32, i32) {
    %c2_i32 = arith.constant 2 : i32
    %0 = arith.muli %arg0, %c2_i32 : i32
    %1 = arith.addi %0, %arg2 : i32
    %c1_i32 = arith.constant 1 : i32
    %2 = arith.minsi %1, %c1_i32 : i32
    %c0_i32 = arith.constant 0 : i32
    %c0_i32_0 = arith.constant 0 : i32
    return %arg1, %c0_i32, %2 : i32, i32, i32
  }
  func.func @transform_1(%arg0: i32, %arg1: i32, %arg2: i32) -> (i32, i32, i32, i32) {
    %c0_i32 = arith.constant 0 : i32
    %c0_i32_0 = arith.constant 0 : i32
    %c0_i32_1 = arith.constant 0 : i32
    return %arg0, %arg1, %c0_i32, %c0_i32_0 : i32, i32, i32, i32
  }
}

</mosaic_0001>

<llo_original>
// kernel: tpu_custom_call.1
$region0: #{tpu_custom_call.1}
  #allocation0 [shape = 'u32[]', space=smem, size = 0x4, offset = 0x4, fixed_abs, tag = 'smem constant byte address 0x4 - core index']
  #allocation1 [shape = 'u32[144,128]{1,0:T(1,128)}', space=vmem, size = 0x12000, scoped, tag = 'internal scratch']
  %s0 = inlined_call_operand.hbm [shape: f32[2,4,256], index: 0, kind: input, shape index: {}]
  %s1 = inlined_call_operand.hbm [shape: f32[1,2,4,4], index: 1, kind: output, shape index: {}]
  %s2 = sld [smem:[#allocation0]]
  $region45: #{tpu_custom_call.1} parent=0
    _
  %s4 = ssub.s32 1, %s2
  %s5 = scalar_select 0, %s4, %s2
  $region1: #{tpu_custom_call.1} parent=0
    #allocation2 [shape = 'u8[4096]{0}', space=vmem, size = 0x1000, scoped, tag = 'input window, operand 0']
    #allocation3 [shape = 's32[2]{0}', space=sflag, size = 0x8, scoped, tag = 'scoped memory for tpu_custom_call.1']
    #allocation4 [shape = 's32[2]{0}', space=sflag, size = 0x8, scoped, tag = 'scoped memory for tpu_custom_call.1']
    #allocation5 [shape = 'u8[4096]{0}', space=vmem, size = 0x1000, scoped, tag = 'output window, operand 0']
    %6 = vsyncpa [#allocation3], 0
    %s7 = scalar_lea.sflag [#allocation3], 1
    %8 = vsyncpa %s7, 0
    %9 = vsyncpa [#allocation4], 0
    %s10 = scalar_lea.sflag [#allocation4], 1
    %11 = vsyncpa %s10, 0
    loop: start=0, step=1, limit=6
    $region2: #{tpu_custom_call.1} parent=1 // loop_pre_header
      _
    $region3: #{tpu_custom_call.1} parent=1 // loop_header
      %s13 = sphi 0, %s17
      %p14 = scmp.ge.s32.totalorder %s13, 6
      %s20 = sphi 0, %s39
      %s21 = sphi 0, %s35
      %s22 = sphi 0, %s31
      %s23 = sphi 0, %s20
      %s24 = sphi 0, %s21
      %s25 = sphi 0, %s22
      %s26 = sphi 0, %s23
      %s27 = sphi 0, %s24
      %s28 = sphi 0, %s25
      %s52 = sphi 0, %s54
      %s55 = sphi 0, %s52
      %s56 = sphi 0, %s55
      %s72 = sphi 0, %s56
      %s80 = sphi 0, %s82
      %s83 = sphi 0, %s80
      %s84 = sphi 0, %s83
      %s100 = sphi 0, %s84
    $region4: #{tpu_custom_call.1} parent=1 // loop_header_branch
      %16 = sbr.rel (%p14) target = $region8
    $region5: #{tpu_custom_call.1} parent=1 // loop_body
      %s18 = ssub.s32 %s13, 1
      %s19 = ssub.s32 %s13, 2
      %s29 = sadd.s32 1, %s22
      %p30 = scmp.ge.s32.totalorder %s29, 2
      %s31 = scalar_select %p30, 0, %s29
      %s32 = sadd.s32 1, %s21
      %s33 = scalar_select %p30, %s32, %s21
      %p34 = scmp.ge.s32.totalorder %s33, 2
      %s35 = scalar_select %p34, 0, %s33
      %s36 = sadd.s32 1, %s20
      %s37 = scalar_select %p34, %s36, %s20
      %p38 = scmp.ge.s32.totalorder %s37, 1
      %s39 = scalar_select %p38, 0, %s37
      %s40 = smul.u32 %s20, 2
      %s41 = sadd.s32 %s40, %s22
      %p42 = scmp.lt.s32.totalorder %s41, 1
      %s43 = scalar_select %p42, %s41, 1
      %s44 = smul.u32 %s39, 2
      %s45 = sadd.s32 %s44, %s31
      %p46 = scmp.lt.s32.totalorder %s45, 1
      %s47 = scalar_select %p46, %s45, 1
      %s48 = ssub.s32 %s21, %s35
      %s49 = ssub.s32 %s43, %s47
      %s50 = sor.u32 %s48, %s49
      %p51 = scmp.eq.s32.totalorder %s50, 0
      %s53 = sadd.s32 %s52, 1
      %s54 = scalar_select %p51, %s52, %s53
      %p57 = pneg %p51
      %p58 = scmp.eq.s32.totalorder %s13, 3
      %p59 = por %p57, %p58
      %p60 = scmp.ne.s32.totalorder %s52, %s55
      %p61 = scmp.eq.s32.totalorder %s13, 0
      %p62 = por %p60, %p61
      %p63 = scmp.ne.s32.totalorder %s52, %s55
      %p64 = scmp.eq.s32.totalorder %s18, 3
      %p65 = por %p63, %p64
      %p66 = scmp.ne.s32.totalorder %s55, %s56
      %p67 = scmp.eq.s32.totalorder %s18, 0
      %p68 = por %p66, %p67
      %p69 = scmp.ne.s32.totalorder %s55, %s56
      %p70 = scmp.eq.s32.totalorder %s19, 3
      %p71 = por %p69, %p70
      %p73 = scmp.ne.s32.totalorder %s56, %s72
      %p74 = scmp.eq.s32.totalorder %s19, 0
      %p75 = por %p73, %p74
      %s76 = ssub.s32 %s20, %s39
      %s77 = ssub.s32 %s21, %s35
      %s78 = sor.u32 %s76, %s77
      %p79 = scmp.eq.s32.totalorder %s78, 0
      %s81 = sadd.s32 %s80, 1
      %s82 = scalar_select %p79, %s80, %s81
      %p85 = pneg %p79
      %p86 = scmp.eq.s32.totalorder %s13, 3
      %p87 = por %p85, %p86
      %p88 = scmp.ne.s32.totalorder %s80, %s83
      %p89 = scmp.eq.s32.totalorder %s13, 0
      %p90 = por %p88, %p89
      %p91 = scmp.ne.s32.totalorder %s80, %s83
      %p92 = scmp.eq.s32.totalorder %s18, 3
      %p93 = por %p91, %p92
      %p94 = scmp.ne.s32.totalorder %s83, %s84
      %p95 = scmp.eq.s32.totalorder %s18, 0
      %p96 = por %p94, %p95
      %p97 = scmp.ne.s32.totalorder %s83, %s84
      %p98 = scmp.eq.s32.totalorder %s19, 3
      %p99 = por %p97, %p98
      %p101 = scmp.ne.s32.totalorder %s84, %s100
      %p102 = scmp.eq.s32.totalorder %s19, 0
      %p103 = por %p101, %p102
      %p104 = scmp.le.s32.totalorder 1, %s13
      %p105 = scmp.lt.s32.totalorder %s13, 5
      %p106 = pnand %p104, %p105
      %p107 = pneg %p106
      // Predicated region
      $region9: #{tpu_custom_call.1} parent=5 // pred_check
        _
      $region10: #{tpu_custom_call.1} parent=5 // pred_check_branch
        %109 = sbr.rel (%p106) target = $region12
      $region11: #{tpu_custom_call.1} parent=5 // pred_region
        %s110 = ssub.s32 %s13, 1
      $region12: #{tpu_custom_call.1} parent=5 // pred_fallthru
        _
      %p111 = scmp.lt.s32.totalorder %s13, 4
      // Predicated region
      $region13: #{tpu_custom_call.1} parent=5 // pred_check
        %p112 = pneg %p111
      $region14: #{tpu_custom_call.1} parent=5 // pred_check_branch
        %114 = sbr.rel (%p112) target = $region16
      $region15: #{tpu_custom_call.1} parent=5 // pred_region
        // Predicated region
        $region17: #{tpu_custom_call.1} parent=15 // pred_check
          %p115 = pneg %p62
        $region18: #{tpu_custom_call.1} parent=15 // pred_check_branch
          %117 = sbr.rel (%p115) target = $region20
        $region19: #{tpu_custom_call.1} parent=15 // pred_region
          %s118 = sand.u32 %s52, 1
          %s119 = scalar_lea.sflag [#allocation3], %s118
          %s120 = sand.u32 %s52, 1
          %s121 = smul.addr %s120, 4
          %s122 = scalar_lea.vmem [#allocation2], %s121
          %s123 = smul.u32 %s20, 2
          %s124 = sadd.s32 %s123, %s22
          %p125 = scmp.lt.s32.totalorder %s124, 1
          %s126 = scalar_select %p125, %s124, 1
          %s128 = ssub.s32 64, 64
          %129 = vsyncadd %s119, %s128
          %s130 = smul.addr %s21, 2
          %s131 = sadd.s32 %s126, %s130
          %s132 = smul.addr %s131, 64
          %s133 = scalar_lea.hbm %s0, %s132
          %s135 = sshll.u32 %s122, 4
          %s136 = int_to_ptr.vmem [resolvable:$true] %s135
          %138 = dma.hbm_to_vmem [thread:$0]  %s133, 64, %s136, %s119
        $region20: #{tpu_custom_call.1} parent=15 // pred_fallthru
          _
      $region16: #{tpu_custom_call.1} parent=5 // pred_fallthru
        _
      %p139 = scmp.le.s32.totalorder 1, %s13
      %p140 = scmp.lt.s32.totalorder %s13, 5
      %p141 = pnand %p139, %p140
      %p142 = pneg %p141
      // Predicated region
      $region21: #{tpu_custom_call.1} parent=5 // pred_check
        _
      $region22: #{tpu_custom_call.1} parent=5 // pred_check_branch
        %144 = sbr.rel (%p141) target = $region24
      $region23: #{tpu_custom_call.1} parent=5 // pred_region
        %s145 = ssub.s32 %s13, 1
        %s146 = sand.u32 %s55, 1
        %s147 = scalar_lea.sflag [#allocation3], %s146
        %s148 = sand.u32 %s55, 1
        %s149 = smul.addr %s148, 4
        %s150 = scalar_lea.vmem [#allocation2], %s149
        // Predicated region
        $region25: #{tpu_custom_call.1} parent=23 // pred_check
          %p151 = pneg %p68
        $region26: #{tpu_custom_call.1} parent=23 // pred_check_branch
          %153 = sbr.rel (%p151) target = $region28
        $region27: #{tpu_custom_call.1} parent=23 // pred_region
          %154 = dma.done %s147, 64
        $region28: #{tpu_custom_call.1} parent=23 // pred_fallthru
          _
        %s155 = sand.u32 %s55, 1
        %s156 = scalar_lea.sflag [#allocation3], %s155
        %s157 = sand.u32 %s55, 1
        %s158 = smul.addr %s157, 4
        %s159 = scalar_lea.vmem [#allocation2], %s158
        %p160 = pneg %p68
        %p161 = pneg %p65
        %p162 = pneg %p96
        %p163 = pneg %p93
        %s164 = sand.u32 %s83, 1
        %s165 = scalar_lea.sflag [#allocation4], %s164
        %s166 = sand.u32 %s83, 1
        %s167 = smul.addr %s166, 4
        %s168 = scalar_lea.vmem [#allocation5], %s167
        %s169 = smul.u32 %s23, 2
        %s170 = sadd.s32 %s169, %s25
        %p171 = scmp.lt.s32.totalorder %s170, 1
        %s172 = scalar_select %p171, %s170, 1
        %p173 = scmp.eq.s32.totalorder %s25, 0
        // Predicated region
        $region29: #{tpu_custom_call.1} parent=23 // pred_check
          %p174 = pneg %p173
        $region30: #{tpu_custom_call.1} parent=23 // pred_check_branch
          %176 = sbr.rel (%p174) target = $region32
        $region31: #{tpu_custom_call.1} parent=23 // pred_region
          %vm177 = vcmask 27648
          %178 = vst.msk [vmem:[%s168] sm:$0xf] %vm177, 0.0
        $region32: #{tpu_custom_call.1} parent=23 // pred_fallthru
          _
        %v179 = vld [vmem:[%s150] sm:$0xf]
        %v180 = vld [vmem:[%s168] sm:$0xf]
        %181 = vmatprep.subr.mxu0 0.0
        %182 = vmatpush1.xpose.msra.mxu0 0.0
        %183 = vmatprep.subr.mxu0 0.0
        %184 = vmatpush1.xpose.msra.mxu0 0.0
        %185 = vmatprep.subr.mxu0 0.0
        %186 = vmatpush1.xpose.msra.mxu0 0.0
        %187 = vmatprep.subr.mxu0 0.0
        %188 = vmatpush1.xpose.msra.mxu0 0.0
        %189 = vmatprep.subr.mxu0 0.0
        %190 = vmatpush1.xpose.msra.mxu0 0.0
        %191 = vmatprep.subr.mxu0 0.0
        %192 = vmatpush1.xpose.msra.mxu0 0.0
        %193 = vmatprep.subr.mxu0 0.0
        %194 = vmatpush1.xpose.msra.mxu0 0.0
        %195 = vmatprep.subr.mxu0 0.0
        %196 = vmatpush1.xpose.msra.mxu0 0.0
        %197 = vmatprep.subr.mxu0 0.0
        %198 = vmatpush1.xpose.msra.mxu0 0.0
        %199 = vmatprep.subr.mxu0 0.0
        %200 = vmatpush1.xpose.msra.mxu0 0.0
        %201 = vmatprep.subr.mxu0 0.0
        %202 = vmatpush1.xpose.msra.mxu0 0.0
        %203 = vmatprep.subr.mxu0 0.0
        %204 = vmatpush1.xpose.msra.mxu0 0.0
        %205 = vmatprep.subr.mxu0 0.0
        %206 = vmatpush1.xpose.msra.mxu0 0.0
        %207 = vmatprep.subr.mxu0 0.0
        %208 = vmatpush1.xpose.msra.mxu0 0.0
        %209 = vmatprep.subr.mxu0 0.0
        %210 = vmatpush1.xpose.msra.mxu0 0.0
        %211 = vmatprep.subr.mxu0 0.0
        %212 = vmatpush1.xpose.msra.mxu0 %v179
        %213 = vmatprep.subr.mxu0 0.0
        %214 = vmatpush2.xpose.msra.mxu0 0.0
        %215 = vmatprep.subr.mxu0 0.0
        %216 = vmatpush2.xpose.msra.mxu0 0.0
        %217 = vmatprep.subr.mxu0 0.0
        %218 = vmatpush2.xpose.msra.mxu0 0.0
        %219 = vmatprep.subr.mxu0 0.0
        %220 = vmatpush2.xpose.msra.mxu0 0.0
        %221 = vmatprep.subr.mxu0 0.0
        %222 = vmatpush2.xpose.msra.mxu0 0.0
        %223 = vmatprep.subr.mxu0 0.0
        %224 = vmatpush2.xpose.msra.mxu0 0.0
        %225 = vmatprep.subr.mxu0 0.0
        %226 = vmatpush2.xpose.msra.mxu0 0.0
        %227 = vmatprep.subr.mxu0 0.0
        %228 = vmatpush2.xpose.msra.mxu0 0.0
        %229 = vmatprep.subr.mxu0 0.0
        %230 = vmatpush2.xpose.msra.mxu0 0.0
        %231 = vmatprep.subr.mxu0 0.0
        %232 = vmatpush2.xpose.msra.mxu0 0.0
        %233 = vmatprep.subr.mxu0 0.0
        %234 = vmatpush2.xpose.msra.mxu0 0.0
        %235 = vmatprep.subr.mxu0 0.0
        %236 = vmatpush2.xpose.msra.mxu0 0.0
        %237 = vmatprep.subr.mxu0 0.0
        %238 = vmatpush2.xpose.msra.mxu0 0.0
        %239 = vmatprep.subr.mxu0 0.0
        %240 = vmatpush2.xpose.msra.mxu0 0.0
        %241 = vmatprep.subr.mxu0 0.0
        %242 = vmatpush2.xpose.msra.mxu0 0.0
        %243 = vmatprep.subr.mxu0 0.0
        %244 = vmatpush2.xpose.msra.mxu0 0.0
        %245 = vmatprep.mubr.f32.mxu0 0.0
        %246 = vmatmul.mubr.f32.gmra.mxu0 %v179
        %v247 = vpop.f32.mrf.mxu0
        %v248 = vadd.f32 0.0, %v247
        %v249 = vpop.f32.mrf.mxu0
        %250 = vdwg.mxu0
        %v251 = vadd.f32 %v180, %v248
        %vm252 = vcmask 27648
        %253 = vst.msk [vmem:[%s168] sm:$0xf] %vm252, %v251
        %s254 = sand.u32 %s83, 1
        %s255 = scalar_lea.sflag [#allocation4], %s254
        %s256 = sand.u32 %s83, 1
        %s257 = smul.addr %s256, 4
        %s258 = scalar_lea.vmem [#allocation5], %s257
        // Predicated region
        $region33: #{tpu_custom_call.1} parent=23 // pred_check
          %p259 = pneg %p93
        $region34: #{tpu_custom_call.1} parent=23 // pred_check_branch
          %261 = sbr.rel (%p259) target = $region36
        $region35: #{tpu_custom_call.1} parent=23 // pred_region
          %s263 = ssub.s32 64, 64
          %264 = vsyncadd %s255, %s263
          %s265 = smul.addr %s23, 2
          %s266 = sadd.s32 %s24, %s265
          %s267 = smul.addr %s266, 64
          %s268 = scalar_lea.hbm %s1, %s267
          %s270 = sshll.u32 %s258, 4
          %s271 = int_to_ptr.vmem [resolvable:$true] %s270
          %273 = dma.vmem_to_hbm [thread:$0]  %s271, 64, %s268, %s255
        $region36: #{tpu_custom_call.1} parent=23 // pred_fallthru
          _
      $region24: #{tpu_custom_call.1} parent=5 // pred_fallthru
        _
      %p274 = scmp.le.s32.totalorder 2, %s13
      // Predicated region
      $region37: #{tpu_custom_call.1} parent=5 // pred_check
        %p275 = pneg %p274
      $region38: #{tpu_custom_call.1} parent=5 // pred_check_branch
        %277 = sbr.rel (%p275) target = $region40
      $region39: #{tpu_custom_call.1} parent=5 // pred_region
        %s278 = ssub.s32 %s13, 2
        // Predicated region
        $region41: #{tpu_custom_call.1} parent=39 // pred_check
          %p279 = pneg %p99
        $region42: #{tpu_custom_call.1} parent=39 // pred_check_branch
          %281 = sbr.rel (%p279) target = $region44
        $region43: #{tpu_custom_call.1} parent=39 // pred_region
          %s282 = sand.u32 %s84, 1
          %s283 = scalar_lea.sflag [#allocation4], %s282
          %s284 = sand.u32 %s84, 1
          %s285 = smul.addr %s284, 4
          %s286 = scalar_lea.vmem [#allocation5], %s285
          %287 = dma.done %s283, 64
        $region44: #{tpu_custom_call.1} parent=39 // pred_fallthru
          _
      $region40: #{tpu_custom_call.1} parent=5 // pred_fallthru
        _
    $region6: #{tpu_custom_call.1} parent=1 // loop_footer
      %s17 = sadd.s32 1, %s13
    $region7: #{tpu_custom_call.1} parent=1 // loop_footer_branch
      %12 = sbr.rel target = $region3
    $region8: #{tpu_custom_call.1} parent=1 // loop_exit
      _
    %288 = vsyncpa [#allocation3], 1
    %s289 = scalar_lea.sflag [#allocation3], 1
    %290 = vsyncpa %s289, 1
    %291 = vsyncpa [#allocation4], 1
    %s292 = scalar_lea.sflag [#allocation4], 1
    %293 = vsyncpa %s292, 1

</llo_original>
